<compile_context>
chip_gen: v6e
topology: v6e:2x2x1
jax: 0.10.0
libtpu: 0.0.40
codegen_flags: <defaults>
</compile_context>

<pallas_src>
import jax
import jax.numpy as jnp
from jax.experimental import pallas as pl
from jax.experimental.pallas import tpu as pltpu

NUM_STATE = 2      # MountainCar-v0 observation dim
NUM_ACTION = 3     # MountainCar-v0 action count
HIDDEN = 128
OUT_PAD = 128      # lane-dense (padded) action-head width used *inside* the kernel
TB_MAX = 1024      # max batch tile (per-step overhead ~0.35 us; VMEM is a non-issue)


def _round_up(n, m):
    return ((n + m - 1) // m) * m


def _num_tensorcores():
    """2 TensorCores per chip on v7x, 1 on v5e/v6e (defensive on detect failure)."""
    try:
        kind = jax.devices()[0].device_kind.lower()
        return 2 if "v7" in kind else 1
    except Exception:
        return 1


def _choose_tiling(batch, n_cores):
    """Return (padded_batch, batch_tile)."""
    bp = max(8, _round_up(batch, 8))              # sublane granule
    min_steps = 2 if (n_cores > 1 and bp >= 16) else 1
    if min_steps == 1 and bp <= TB_MAX:
        return bp, bp                             # single full tile, no extra padding
    if min_steps == 2 and bp <= 2 * TB_MAX:
        tb = _round_up(pl.cdiv(bp, 2), 8)         # two (near-)equal halves for 2 TCs
        return 2 * tb, tb
    # Large batch: pad to a 128-row granule (caps waste) and pick the largest
    # 128-multiple tile that divides it, stays <= TB_MAX and keeps >= min_steps.
    bp = _round_up(bp, 128)
    tb = 128
    for cand in range(128, TB_MAX + 1, 128):
        if bp % cand == 0 and bp // cand >= min_steps:
            tb = cand
    return bp, tb


def actor_kernel(x_ref, w1_ref, b1_ref, w2_ref, b2_ref, out_ref):
    # x: (tb, 2) f32 | w1: (2, 128) f32 | b1: (1, 128) f32
    # w2: (128, 128) bf16 (zero-padded cols) | b2: (1, 128) f32 (-1e30 padded)
    # out: (tb, 3) f32
    x = x_ref[...]
    w1 = w1_ref[...]

    # fc1 + ReLU on the VPU: a depth-2 contraction would leave the MXU ~99% idle,
    # so two broadcast multiply-adds on a (tb,128) tile are strictly cheaper.
    h = x[:, 0:1] * w1[0:1, :] + x[:, 1:2] * w1[1:2, :] + b1_ref[...]
    h = jnp.maximum(h, 0.0)

    # action_head on the MXU: bf16 inputs, f32 accumulation (one MXU pass instead
    # of the ~3x-decomposed f32xf32). Padded cols: zero weight, bias -1e30.
    logits = jnp.dot(h.astype(jnp.bfloat16), w2_ref[...],
                     preferred_element_type=jnp.float32) + b2_ref[...]

    # Numerically stable softmax over the lane-dense (padded) action axis;
    # padded logits are -1e30 so exp() underflows to exactly 0.
    m = jnp.max(logits, axis=-1, keepdims=True)
    e = jnp.exp(logits - m)
    s = jnp.sum(e, axis=-1, keepdims=True)
    probs = e / s                                  # exact divide: rows sum to 1

    # Narrow store: only the 3 real action columns go back to HBM.
    out_ref[...] = probs[:, :NUM_ACTION]


def prepare_params(w1, b1, w2, b2):
    """One-time (hoisted) padding / casting of the parameters.

    Call once after (re)initializing or updating the weights; pass the result
    to actor_forward. Weights are stored transposed: (in_features, out_features).
    """
    w1 = jnp.asarray(w1, jnp.float32).reshape(NUM_STATE, HIDDEN)
    b1 = jnp.asarray(b1, jnp.float32).reshape(1, HIDDEN)
    w2 = jnp.asarray(w2, jnp.float32).reshape(HIDDEN, NUM_ACTION)
    b2 = jnp.asarray(b2, jnp.float32).reshape(1, NUM_ACTION)
    # Lane-dense padded action head: zero weights + (-1e30) bias in padded cols.
    w2p = (jnp.zeros((HIDDEN, OUT_PAD), jnp.bfloat16)
           .at[:, :NUM_ACTION].set(w2.astype(jnp.bfloat16)))
    b2p = (jnp.full((1, OUT_PAD), -1e30, jnp.float32)
           .at[:, :NUM_ACTION].set(b2))
    return w1, b1, w2p, b2p


def actor_forward(x, params):
    """x: (B, NUM_STATE); params from prepare_params. Returns (B, NUM_ACTION)."""
    w1, b1, w2p, b2p = params
    x = jnp.asarray(x, jnp.float32)
    B = x.shape[0]

    n_cores = _num_tensorcores()
    bp, tb = _choose_tiling(B, n_cores)
    x_in = x if bp == B else jnp.zeros((bp, NUM_STATE), jnp.float32).at[:B, :].set(x)

    grid = (bp // tb,)
    # CORE_PARALLEL shards grid steps across the 2 TCs on v7x; plain "parallel"
    # elsewhere (single TC, semantics string barely changes codegen).
    dim_sem = ((pltpu.CORE_PARALLEL,) if (n_cores > 1 and grid[0] > 1)
               else ("parallel",))

    probs = pl.pallas_call(
        actor_kernel,
        out_shape=jax.ShapeDtypeStruct((bp, NUM_ACTION), jnp.float32),
        grid=grid,
        in_specs=[
            pl.BlockSpec((tb, NUM_STATE), lambda i: (i, 0)),       # x tile
            pl.BlockSpec((NUM_STATE, HIDDEN), lambda i: (0, 0)),   # w1 resident
            pl.BlockSpec((1, HIDDEN), lambda i: (0, 0)),           # b1 resident
            pl.BlockSpec((HIDDEN, OUT_PAD), lambda i: (0, 0)),     # w2 resident (bf16)
            pl.BlockSpec((1, OUT_PAD), lambda i: (0, 0)),          # b2 resident
        ],
        out_specs=pl.BlockSpec((tb, NUM_ACTION), lambda i: (i, 0)),
        compiler_params=pltpu.CompilerParams(dimension_semantics=dim_sem),
    )(x_in, w1, b1, w2p, b2p)

    return probs if bp == B else probs[:B]


def init_params(key):
    # Deterministic synthetic init mirroring nn.Linear shapes
    # (weights stored transposed: (in_features, out_features)).
    k1, k2, k3, k4 = jax.random.split(key, 4)
    bound1 = 1.0 / jnp.sqrt(NUM_STATE)
    bound2 = 1.0 / jnp.sqrt(HIDDEN)
    w1 = jax.random.uniform(k1, (NUM_STATE, HIDDEN), jnp.float32, -bound1, bound1)
    b1 = jax.random.uniform(k2, (1, HIDDEN), jnp.float32, -bound1, bound1)
    w2 = jax.random.uniform(k3, (HIDDEN, NUM_ACTION), jnp.float32, -bound2, bound2)
    b2 = jax.random.uniform(k4, (1, NUM_ACTION), jnp.float32, -bound2, bound2)
    return w1, b1, w2, b2


if __name__ == "__main__":
    key = jax.random.PRNGKey(0)
    kx, kp = jax.random.split(key)

    B = 8  # small batch of MountainCar observations
    x = jax.random.normal(kx, (B, NUM_STATE), dtype=jnp.float32)
    w1, b1, w2, b2 = init_params(kp)

    params = prepare_params(w1, b1, w2, b2)   # one-time padding / bf16 cast (hoisted)
    probs = actor_forward(x, params)
    probs = jax.block_until_ready(probs)

    # sanity: reference in plain JAX (full float32)
    h_ref = jnp.maximum(x @ w1 + b1, 0.0)
    ref = jax.nn.softmax(h_ref @ w2 + b2, axis=1)
    assert probs.shape == (B, NUM_ACTION)
    assert bool(jnp.all(jnp.isfinite(probs)))
    assert jnp.allclose(jnp.sum(probs, axis=1), 1.0, atol=1e-5)
    # bf16 MXU inputs -> modest tolerance vs the f32 reference
    assert jnp.allclose(probs, ref, atol=2e-2), "mismatch vs reference"

    print("KERNEL_OK")
</pallas_src>

<mosaic_0001>
module attributes {stable_mosaic.version = 11 : i64} {
  func.func @actor_kernel(%arg0: i32, %arg1: memref<8x2xf32, #tpu.memory_space<vmem>>, %arg2: memref<2x128xf32, #tpu.memory_space<vmem>>, %arg3: memref<1x128xf32, #tpu.memory_space<vmem>>, %arg4: memref<128x128xbf16, #tpu.memory_space<vmem>>, %arg5: memref<1x128xf32, #tpu.memory_space<vmem>>, %arg6: memref<8x3xf32, #tpu.memory_space<vmem>>) attributes {dimension_semantics = [#tpu.dimension_semantics<parallel>], iteration_bounds = array<i64: 1>, scalar_prefetch = 0 : i64, scratch_operands = 0 : i64, tpu.core_type = #tpu.core_type<tc>, window_params = [{transform_indices = @transform_0, window_bounds = array<i64: 8, 2>}, {pipeline_mode = #tpu.pipeline_mode<synchronous>, transform_indices = @transform_1, window_bounds = array<i64: 2, 128>}, {pipeline_mode = #tpu.pipeline_mode<synchronous>, transform_indices = @transform_2, window_bounds = array<i64: 1, 128>}, {pipeline_mode = #tpu.pipeline_mode<synchronous>, transform_indices = @transform_3, window_bounds = array<i64: 128, 128>}, {pipeline_mode = #tpu.pipeline_mode<synchronous>, transform_indices = @transform_4, window_bounds = array<i64: 1, 128>}, {transform_indices = @transform_5, window_bounds = array<i64: 8, 3>}]} {
    %c0 = arith.constant 0 : index
    %c0_0 = arith.constant 0 : index
    %0 = vector.load %arg1[%c0, %c0_0] : memref<8x2xf32, #tpu.memory_space<vmem>>, vector<8x2xf32>
    %c0_1 = arith.constant 0 : index
    %c0_2 = arith.constant 0 : index
    %1 = vector.load %arg2[%c0_1, %c0_2] : memref<2x128xf32, #tpu.memory_space<vmem>>, vector<2x128xf32>
    %2 = vector.extract_strided_slice %0 {offsets = [0, 0], sizes = [8, 1], strides = [1, 1]} : vector<8x2xf32> to vector<8x1xf32>
    %3 = vector.extract_strided_slice %1 {offsets = [0, 0], sizes = [1, 128], strides = [1, 1]} : vector<2x128xf32> to vector<1x128xf32>
    %4 = vector.broadcast %2 : vector<8x1xf32> to vector<8x128xf32>
    %5 = vector.broadcast %3 : vector<1x128xf32> to vector<8x128xf32>
    %6 = arith.mulf %4, %5 : vector<8x128xf32>
    %7 = vector.extract_strided_slice %0 {offsets = [0, 1], sizes = [8, 1], strides = [1, 1]} : vector<8x2xf32> to vector<8x1xf32>
    %8 = vector.extract_strided_slice %1 {offsets = [1, 0], sizes = [1, 128], strides = [1, 1]} : vector<2x128xf32> to vector<1x128xf32>
    %9 = vector.broadcast %7 : vector<8x1xf32> to vector<8x128xf32>
    %10 = vector.broadcast %8 : vector<1x128xf32> to vector<8x128xf32>
    %11 = arith.mulf %9, %10 : vector<8x128xf32>
    %12 = arith.addf %6, %11 : vector<8x128xf32>
    %c0_3 = arith.constant 0 : index
    %c0_4 = arith.constant 0 : index
    %13 = vector.load %arg3[%c0_3, %c0_4] : memref<1x128xf32, #tpu.memory_space<vmem>>, vector<1x128xf32>
    %14 = vector.broadcast %13 : vector<1x128xf32> to vector<8x128xf32>
    %15 = arith.addf %12, %14 : vector<8x128xf32>
    %cst = arith.constant 0.000000e+00 : f32
    %16 = vector.broadcast %cst : f32 to vector<8x128xf32>
    %17 = arith.maximumf %15, %16 : vector<8x128xf32>
    %18 = arith.truncf %17 : vector<8x128xf32> to vector<8x128xbf16>
    %c0_5 = arith.constant 0 : index
    %c0_6 = arith.constant 0 : index
    %19 = vector.load %arg4[%c0_5, %c0_6] : memref<128x128xbf16, #tpu.memory_space<vmem>>, vector<128x128xbf16>
    %cst_7 = arith.constant dense<0.000000e+00> : vector<8x128xf32>
    %20 = tpu.matmul %18, %19, %cst_7 {dimension_numbers = #tpu.dot_dimension_numbers<[1], [0], [0], [1], [0, 0, 1, 1], [], []>} : vector<8x128xbf16>, vector<128x128xbf16>, vector<8x128xf32> -> vector<8x128xf32>
    %c0_8 = arith.constant 0 : index
    %c0_9 = arith.constant 0 : index
    %21 = vector.load %arg5[%c0_8, %c0_9] : memref<1x128xf32, #tpu.memory_space<vmem>>, vector<1x128xf32>
    %22 = vector.broadcast %21 : vector<1x128xf32> to vector<8x128xf32>
    %23 = arith.addf %20, %22 : vector<8x128xf32>
    %cst_10 = arith.constant dense<0xFF800000> : vector<8xf32>
    %24 = vector.multi_reduction <maximumf>, %23, %cst_10 [1] : vector<8x128xf32> to vector<8xf32>
    %25 = vector.shape_cast %24 : vector<8xf32> to vector<8x1xf32>
    %26 = vector.broadcast %25 : vector<8x1xf32> to vector<8x128xf32>
    %27 = arith.subf %23, %26 : vector<8x128xf32>
    %28 = math.exp %27 : vector<8x128xf32>
    %cst_11 = arith.constant dense<0.000000e+00> : vector<8xf32>
    %29 = vector.multi_reduction <add>, %28, %cst_11 [1] : vector<8x128xf32> to vector<8xf32>
    %30 = vector.shape_cast %29 : vector<8xf32> to vector<8x1xf32>
    %31 = vector.broadcast %30 : vector<8x1xf32> to vector<8x128xf32>
    %32 = arith.divf %28, %31 : vector<8x128xf32>
    %33 = vector.extract_strided_slice %32 {offsets = [0, 0], sizes = [8, 3], strides = [1, 1]} : vector<8x128xf32> to vector<8x3xf32>
    %c0_12 = arith.constant 0 : index
    %c0_13 = arith.constant 0 : index
    %34 = vector.load %arg6[%c0_12, %c0_13] : memref<8x3xf32, #tpu.memory_space<vmem>>, vector<8x3xf32>
    tpu.vector_store %arg6[%c0_12, %c0_13], %33 {strides = array<i32>} : memref<8x3xf32, #tpu.memory_space<vmem>>, vector<8x3xf32>,
    return
  }
  func.func @transform_0(%arg0: i32) -> (i32, i32) {
    %c0_i32 = arith.constant 0 : i32
    %c0_i32_0 = arith.constant 0 : i32
    return %arg0, %c0_i32 : i32, i32
  }
  func.func @transform_1(%arg0: i32) -> (i32, i32) {
    %c0_i32 = arith.constant 0 : i32
    %c0_i32_0 = arith.constant 0 : i32
    %c0_i32_1 = arith.constant 0 : i32
    return %c0_i32, %c0_i32_0 : i32, i32
  }
  func.func @transform_2(%arg0: i32) -> (i32, i32) {
    %c0_i32 = arith.constant 0 : i32
    %c0_i32_0 = arith.constant 0 : i32
    %c0_i32_1 = arith.constant 0 : i32
    return %c0_i32, %c0_i32_0 : i32, i32
  }
  func.func @transform_3(%arg0: i32) -> (i32, i32) {
    %c0_i32 = arith.constant 0 : i32
    %c0_i32_0 = arith.constant 0 : i32
    %c0_i32_1 = arith.constant 0 : i32
    return %c0_i32, %c0_i32_0 : i32, i32
  }
  func.func @transform_4(%arg0: i32) -> (i32, i32) {
    %c0_i32 = arith.constant 0 : i32
    %c0_i32_0 = arith.constant 0 : i32
    %c0_i32_1 = arith.constant 0 : i32
    return %c0_i32, %c0_i32_0 : i32, i32
  }
  func.func @transform_5(%arg0: i32) -> (i32, i32) {
    %c0_i32 = arith.constant 0 : i32
    %c0_i32_0 = arith.constant 0 : i32
    return %arg0, %c0_i32 : i32, i32
  }
}

</mosaic_0001>

<llo_original>
// kernel: tpu_custom_call.1
$region0: #{tpu_custom_call.1}
  #allocation0 [shape = 'u32[]', space=smem, size = 0x4, offset = 0x4, fixed_abs, tag = 'smem constant byte address 0x4 - core index']
  #allocation1 [shape = 'u32[144,128]{1,0:T(1,128)}', space=vmem, size = 0x12000, scoped, tag = 'internal scratch']
  %s0 = inlined_call_operand.vmem [shape: f32[8,2], index: 0, kind: input, shape index: {}]
  %s1 = inlined_call_operand.vmem [shape: f32[2,128], index: 1, kind: input, shape index: {}]
  %s2 = inlined_call_operand.vmem [shape: f32[1,128], index: 2, kind: input, shape index: {}]
  %s3 = inlined_call_operand.hbm [shape: bf16[128,128], index: 3, kind: input, shape index: {}]
  %s4 = inlined_call_operand.vmem [shape: f32[1,128], index: 4, kind: input, shape index: {}]
  %s5 = inlined_call_operand.vmem [shape: f32[8,3], index: 5, kind: output, shape index: {}]
  %s6 = sld [smem:[#allocation0]]
  $region34: #{tpu_custom_call.1} parent=0
    _
  %s8 = ssub.s32 1, %s6
  %s9 = scalar_select 0, %s8, %s6
  $region1: #{tpu_custom_call.1} parent=0
    #allocation2 [shape = 'u8[32768]{0}', space=vmem, size = 0x8000, scoped, tag = 'input window, operand 3, single buffered']
    #allocation3 [shape = 's32[1]{0}', space=sflag, size = 0x4, scoped, tag = 'scoped memory for tpu_custom_call.1']
    %10 = vsyncpa [#allocation3], 0
    // Predicated region
    $region2: #{tpu_custom_call.1} parent=1 // pred_check
      _
    $region3: #{tpu_custom_call.1} parent=1 // pred_check_branch
      %12 = sbr.rel (0) target = $region5
    $region4: #{tpu_custom_call.1} parent=1 // pred_region
      _
    $region5: #{tpu_custom_call.1} parent=1 // pred_fallthru
      _
    // Predicated region
    $region6: #{tpu_custom_call.1} parent=1 // pred_check
      _
    $region7: #{tpu_custom_call.1} parent=1 // pred_check_branch
      %14 = sbr.rel (0) target = $region9
    $region8: #{tpu_custom_call.1} parent=1 // pred_region
      _
    $region9: #{tpu_custom_call.1} parent=1 // pred_fallthru
      _
    // Predicated region
    $region10: #{tpu_custom_call.1} parent=1 // pred_check
      _
    $region11: #{tpu_custom_call.1} parent=1 // pred_check_branch
      %16 = sbr.rel (0) target = $region13
    $region12: #{tpu_custom_call.1} parent=1 // pred_region
      _
    $region13: #{tpu_custom_call.1} parent=1 // pred_fallthru
      _
    // Predicated region
    $region14: #{tpu_custom_call.1} parent=1 // pred_check
      _
    $region15: #{tpu_custom_call.1} parent=1 // pred_check_branch
      %18 = sbr.rel (0) target = $region17
    $region16: #{tpu_custom_call.1} parent=1 // pred_region
      %s20 = ssub.s32 1024, 1024
      %21 = vsyncadd [#allocation3], %s20
      %s22 = sshll.u32 [#allocation2], 4
      %s23 = int_to_ptr.vmem [resolvable:$true] %s22
      %28 = dma.hbm_to_vmem [thread:$0]  %s3, 1024, %s23, [#allocation3], 64, 64, 4
    $region17: #{tpu_custom_call.1} parent=1 // pred_fallthru
      _
    // Predicated region
    $region18: #{tpu_custom_call.1} parent=1 // pred_check
      _
    $region19: #{tpu_custom_call.1} parent=1 // pred_check_branch
      %30 = sbr.rel (0) target = $region21
    $region20: #{tpu_custom_call.1} parent=1 // pred_region
      _
    $region21: #{tpu_custom_call.1} parent=1 // pred_fallthru
      _
    // Predicated region
    $region22: #{tpu_custom_call.1} parent=1 // pred_check
      _
    $region23: #{tpu_custom_call.1} parent=1 // pred_check_branch
      %32 = sbr.rel (0) target = $region25
    $region24: #{tpu_custom_call.1} parent=1 // pred_region
      %33 = dma.done [#allocation3], 1024
    $region25: #{tpu_custom_call.1} parent=1 // pred_fallthru
      _
    %v35 = vld [vmem:[%s0] sm:$0xff]
    %v36 = vld [vmem:[%s1] sm:$0x3]
    %38 = vset.pattern.permute.xlu0 0
    %39 = vperm.xlu0 %38, %v35
    %v40 = vpop.permute.xlu0 %39
    %v42 = vlaneseq
    %v43 = vshrl.u32 %v42, 7
    %v44 = vsub.s32 0, %v43
    %v45 = vrot.slane %v36, %v44
    %v46 = vmul.f32 %v40, %v45
    %47 = vset.pattern.permute.xlu0 1
    %48 = vperm.xlu0 %47, %v35
    %v49 = vpop.permute.xlu0 %48
    %v51 = vlaneseq
    %v52 = vshrl.u32 %v51, 7
    %v53 = vsub.s32 1, %v52
    %v54 = vrot.slane %v36, %v53
    %v55 = vmul.f32 %v49, %v54
    %v56 = vadd.f32 %v46, %v55
    %v57 = vld [vmem:[%s2] sm:$0x1]
    %v59 = vlaneseq
    %v60 = vshrl.u32 %v59, 7
    %v61 = vsub.s32 0, %v60
    %v62 = vrot.slane %v57, %v61
    %v64 = vadd.f32 %v56, %v62
    %v65 = vmax.f32 %v64, 0.0
    %v66 = vpack.c.bf16 %v65, %v65
    %v67 = vld [vmem:[#allocation2] sm:$0xf]
    %v68 = vld [vmem:[#allocation2 + $0x4] sm:$0xf]
    %v69 = vld [vmem:[#allocation2 + $0x8] sm:$0xf]
    %v70 = vld [vmem:[#allocation2 + $0xc] sm:$0xf]
    %v71 = vld [vmem:[#allocation2 + $0x10] sm:$0xf]
    %v72 = vld [vmem:[#allocation2 + $0x14] sm:$0xf]
    %v73 = vld [vmem:[#allocation2 + $0x18] sm:$0xf]
    %v74 = vld [vmem:[#allocation2 + $0x1c] sm:$0xf]
    %v75 = vld [vmem:[#allocation2 + $0x20] sm:$0xf]
    %v76 = vld [vmem:[#allocation2 + $0x24] sm:$0xf]
    %v77 = vld [vmem:[#allocation2 + $0x28] sm:$0xf]
    %v78 = vld [vmem:[#allocation2 + $0x2c] sm:$0xf]
    %v79 = vld [vmem:[#allocation2 + $0x30] sm:$0xf]
    %v80 = vld [vmem:[#allocation2 + $0x34] sm:$0xf]
    %v81 = vld [vmem:[#allocation2 + $0x38] sm:$0xf]
    %v82 = vld [vmem:[#allocation2 + $0x3c] sm:$0xf]
    %v83 = vld [vmem:[%s4] sm:$0x1]
    %v85 = vlaneseq
    %v86 = vshrl.u32 %v85, 7
    %v87 = vsub.s32 0, %v86
    %v88 = vrot.slane %v83, %v87
    %v106 = vunpack.c.l.b16 %v67
    %v107 = vunpack.c.l.b16 %v68
    %v108 = vunpack.c.l.b16 %v69
    %v109 = vunpack.c.l.b16 %v70
    %v110 = vunpack.c.l.b16 %v71
    %v111 = vunpack.c.l.b16 %v72
    %v112 = vunpack.c.l.b16 %v73
    %v113 = vunpack.c.l.b16 %v74
    %v114 = vunpack.c.l.b16 %v75
    %v115 = vunpack.c.l.b16 %v76
    %v116 = vunpack.c.l.b16 %v77
    %v117 = vunpack.c.l.b16 %v78
    %v118 = vunpack.c.l.b16 %v79
    %v119 = vunpack.c.l.b16 %v80
    %v120 = vunpack.c.l.b16 %v81
    %v121 = vunpack.c.l.b16 %v82
    %v122 = vpack.c.b16 %v107, %v106
    %v123 = vpack.c.b16 %v109, %v108
    %v124 = vpack.c.b16 %v111, %v110
    %v125 = vpack.c.b16 %v113, %v112
    %v126 = vpack.c.b16 %v115, %v114
    %v127 = vpack.c.b16 %v117, %v116
    %v128 = vpack.c.b16 %v119, %v118
    %v129 = vpack.c.b16 %v121, %v120
    %138 = vmatprep.subr.bf16.mxu0 0
    %139 = vmatpush1.bf16.msra.mxu0 %v129
    %140 = vmatprep.subr.bf16.mxu0 0
    %141 = vmatpush1.bf16.msra.mxu0 %v128
    %142 = vmatprep.subr.bf16.mxu0 0
    %143 = vmatpush1.bf16.msra.mxu0 %v127
    %144 = vmatprep.subr.bf16.mxu0 0
    %145 = vmatpush1.bf16.msra.mxu0 %v126
    %146 = vmatprep.subr.bf16.mxu0 0
    %147 = vmatpush1.bf16.msra.mxu0 %v125
    %148 = vmatprep.subr.bf16.mxu0 0
    %149 = vmatpush1.bf16.msra.mxu0 %v124
    %150 = vmatprep.subr.bf16.mxu0 0
    %151 = vmatpush1.bf16.msra.mxu0 %v123
    %152 = vmatprep.subr.bf16.mxu0 0
    %153 = vmatpush1.bf16.msra.mxu0 %v122
    %154 = vmatprep.subr.bf16.mxu0 0
    %155 = vmatpush2.bf16.msra.mxu0 0
    %156 = vmatprep.subr.bf16.mxu0 0
    %157 = vmatpush2.bf16.msra.mxu0 0
    %158 = vmatprep.subr.bf16.mxu0 0
    %159 = vmatpush2.bf16.msra.mxu0 0
    %160 = vmatprep.subr.bf16.mxu0 0
    %161 = vmatpush2.bf16.msra.mxu0 0
    %162 = vmatprep.subr.bf16.mxu0 0
    %163 = vmatpush2.bf16.msra.mxu0 0
    %164 = vmatprep.subr.bf16.mxu0 0
    %165 = vmatpush2.bf16.msra.mxu0 0
    %166 = vmatprep.subr.bf16.mxu0 0
    %167 = vmatpush2.bf16.msra.mxu0 0
    %168 = vmatprep.subr.bf16.mxu0 0
    %169 = vmatpush2.bf16.msra.mxu0 0
    %170 = vmatprep.mubr.bf16.mxu0 0
    %171 = vmatmul.mubr.bf16.gmra.mxu0 %v66
    %v172 = vpop.f32.mrf.mxu0
    %v173 = vadd.f32 %v88, %v172
    %v174 = vpop.f32.mrf.mxu0
    %v175 = vpop.f32.mrf.mxu0
    %v176 = vpop.f32.mrf.mxu0
    %177 = vdwg.mxu0
    %178 = vmax.xlane.f32.xlu0 %v173
    %v179 = vpop.xlane.xlu0 %178
    %v180 = vsub.f32 %v173, %v179
    %v181 = vmul.f32 %v180, 1.442695
    %v182 = vpow.pop %v181
    %183 = vadd.xlane.f32.xlu0 %v182
    %v184 = vpop.xlane.xlu0 %183
    %v185 = vrcp.pop %v184
    %v186 = vmul.f32 %v182, %v185
    %vm187 = vcmask 23552
    %188 = vst.msk [vmem:[%s5] sm:$0xff] %vm187, %v186
    // Predicated region
    $region26: #{tpu_custom_call.1} parent=1 // pred_check
      _
    $region27: #{tpu_custom_call.1} parent=1 // pred_check_branch
      %190 = sbr.rel (0) target = $region29
    $region28: #{tpu_custom_call.1} parent=1 // pred_region
      _
    $region29: #{tpu_custom_call.1} parent=1 // pred_fallthru
      _
    // Predicated region
    $region30: #{tpu_custom_call.1} parent=1 // pred_check
      _
    $region31: #{tpu_custom_call.1} parent=1 // pred_check_branch
      %192 = sbr.rel (0) target = $region33
    $region32: #{tpu_custom_call.1} parent=1 // pred_region
      _
    $region33: #{tpu_custom_call.1} parent=1 // pred_fallthru
      _
    %193 = vsyncpa [#allocation3], 1

</llo_original>
